<compile_context>
chip_gen: v7x
topology: tpu7x:2x2x1
jax: 0.10.0
libtpu: 0.0.40
codegen_flags: <defaults>
</compile_context>

<pallas_src>
import functools

import jax
import jax.numpy as jnp
import numpy as np
from jax import lax
from jax.experimental import pallas as pl
from jax.experimental.pallas import tpu as pltpu


def _mbd_feat_kernel(xi_ref, xj_ref, w_ref, s_ref, feat_ref,
                     acti_ref, actj_ref, acc_ref, *, tj_inner, n_inner):
    """One (i-tile, j-tile) grid step of the minibatch-discrimination features."""
    j = pl.program_id(1)

    @pl.when(j == 0)
    def _init():
        # Projection of the i-tile (resident for the whole j sweep) + acc init.
        acti_ref[...] = jnp.dot(xi_ref[...], w_ref[...],
                                preferred_element_type=jnp.float32)
        acc_ref[...] = jnp.zeros_like(acc_ref)

    # Projection of the current j-tile. Tiny MXU matmul; MXU has slack here.
    actj_ref[...] = jnp.dot(xj_ref[...], w_ref[...],
                            preferred_element_type=jnp.float32)

    act_i = acti_ref[...]              # (ti, nkdk), stays in vregs across the loop
    s = s_ref[...]                     # (nkdk, nk_pad) block-diag segment-sum matrix
    ti, nkdk = act_i.shape
    nk_pad = s.shape[1]

    def body(jj, acc):
        off = pl.multiple_of(jj * tj_inner, tj_inner)
        aj = actj_ref[pl.ds(off, tj_inner), :]                      # (tj_inner, nkdk)
        # All-pairs |act_i - act_j| for this chunk, kept in vregs (never stored).
        diff = jnp.abs(act_i[:, None, :] - aj[None, :, :])
        diff = diff.reshape(ti * tj_inner, nkdk)
        # Per-kernel L1 reduction as one MXU matmul against the 0/1 S matrix.
        l1 = jnp.dot(diff, s, preferred_element_type=jnp.float32)   # (ti*tj_inner, nk_pad)
        e = jnp.exp(-l1).reshape(ti, tj_inner, nk_pad)
        return acc + jnp.sum(e, axis=1)

    acc = lax.fori_loop(0, n_inner, body,
                        jnp.zeros(acc_ref.shape, jnp.float32),
                        unroll=(n_inner <= 8))
    acc_ref[...] += acc

    @pl.when(j == pl.num_programs(1) - 1)
    def _finalize():
        feat_ref[...] = acc_ref[...].astype(feat_ref.dtype)


def minibatch_discrimination(x, weight, num_kernel, dim_kernel):
    """x: (B, input_dim) f32, weight: (input_dim, num_kernel*dim_kernel) f32."""
    batch, input_dim = x.shape
    nkdk = num_kernel * dim_kernel
    assert weight.shape == (input_dim, nkdk)

    # ---------------- tile plan ----------------
    ti = min(batch, 128)                      # i-tile: fills the MXU M dimension
    while batch % ti:
        ti -= 1
    tj = min(batch, 128)                      # j-tile DMA'd per grid step
    while batch % tj:
        tj -= 1
    # Inner j-chunk: keep the (ti, tj_inner, nkdk) f32 diff block <= ~128 KiB
    # (~32 vregs) so it never spills to VMEM.
    tj_inner = max(1, min(tj, (128 * 1024) // max(1, ti * nkdk * 4)))
    while tj % tj_inner:
        tj_inner -= 1
    n_inner = tj // tj_inner

    # Lane-dense feature width: pad NK up to a multiple of 128 lanes; padded
    # columns compute harmless garbage (exp(0) sums) and are sliced off below.
    nk_pad = ((num_kernel + 127) // 128) * 128

    # Block-diagonal segment-sum matrix S[k*DK + d, k] = 1 (0 in padded cols),
    # passed as a tiny resident input instead of being rebuilt per grid step.
    seg = (jnp.arange(nkdk, dtype=jnp.int32) // dim_kernel)[:, None]
    col = jnp.arange(nk_pad, dtype=jnp.int32)[None, :]
    s = (seg == col).astype(jnp.float32)                     # (nkdk, nk_pad)

    grid = (batch // ti, batch // tj)
    kernel = functools.partial(_mbd_feat_kernel, tj_inner=tj_inner, n_inner=n_inner)

    # Conservative VMEM budget, capped at 48 MiB so the plan also fits v7x.
    est_bytes = 4 * (2 * 2 * ti * input_dim + 2 * 2 * tj * input_dim
                     + input_dim * nkdk + nkdk * nk_pad + 2 * ti * nk_pad
                     + ti * nkdk + tj * nkdk + ti * nk_pad)
    vmem_limit = int(min(48 * 1024 * 1024, max(4 * 1024 * 1024, 2 * est_bytes)))

    feat_pad = pl.pallas_call(
        kernel,
        out_shape=jax.ShapeDtypeStruct((batch, nk_pad), x.dtype),
        grid=grid,
        in_specs=[
            pl.BlockSpec((ti, input_dim), lambda i, j: (i, 0)),    # x rows, i-tile
            pl.BlockSpec((tj, input_dim), lambda i, j: (j, 0)),    # x rows, j-tile
            pl.BlockSpec((input_dim, nkdk), lambda i, j: (0, 0)),  # W (resident)
            pl.BlockSpec((nkdk, nk_pad), lambda i, j: (0, 0)),     # S (resident)
        ],
        out_specs=pl.BlockSpec((ti, nk_pad), lambda i, j: (i, 0)),
        scratch_shapes=[
            pltpu.VMEM((ti, nkdk), jnp.float32),    # act_i cache (per i-row)
            pltpu.VMEM((tj, nkdk), jnp.float32),    # act_j staging
            pltpu.VMEM((ti, nk_pad), jnp.float32),  # exp-sum accumulator
        ],
        compiler_params=pltpu.CompilerParams(
            dimension_semantics=("parallel", "arbitrary"),
            vmem_limit_bytes=vmem_limit,
        ),
    )(x, x, weight, s)

    feat = feat_pad[:, :num_kernel]
    # Concat done outside the kernel (x never makes a redundant VMEM round-trip).
    return jnp.concatenate([x, feat], axis=1)


def _reference(x, weight, num_kernel, dim_kernel):
    """Pure-JAX reference matching the PyTorch forward exactly."""
    act = x @ weight                                         # (B, NK*DK)
    act = act.reshape(-1, num_kernel, dim_kernel)            # (B, NK, DK)
    a = act[:, :, :, None]                                   # (B, NK, DK, 1)
    b = jnp.transpose(act, (1, 2, 0))[None]                  # (1, NK, DK, B)
    l1 = jnp.sum(jnp.abs(a - b), axis=2)                     # (B, NK, B)
    feat = jnp.sum(jnp.exp(-l1), axis=2)                     # (B, NK)
    return jnp.concatenate([x, feat], axis=1)


if __name__ == "__main__":
    # Small shapes consistent with the module's forward.
    batch = 8
    input_dim = 32
    num_kernel = 16
    dim_kernel = 8

    key = jax.random.PRNGKey(0)
    kx, kw = jax.random.split(key)

    x = jax.random.normal(kx, (batch, input_dim), dtype=jnp.float32)

    # Deterministic xavier_uniform init for weight (input_dim, NK*DK):
    fan_in, fan_out = input_dim, num_kernel * dim_kernel
    limit = float(np.sqrt(6.0 / (fan_in + fan_out)))
    weight = jax.random.uniform(
        kw, (fan_in, fan_out), dtype=jnp.float32, minval=-limit, maxval=limit
    )

    out = minibatch_discrimination(x, weight, num_kernel, dim_kernel)
    out = jax.block_until_ready(out)

    ref = _reference(x, weight, num_kernel, dim_kernel)
    np.testing.assert_allclose(np.asarray(out), np.asarray(ref), rtol=1e-5, atol=1e-5)

    print("KERNEL_OK")
</pallas_src>

<mosaic_0001>
module attributes {stable_mosaic.version = 11 : i64} {
  func.func @_mbd_feat_kernel(%arg0: i32, %arg1: i32, %arg2: memref<8x32xf32, #tpu.memory_space<vmem>>, %arg3: memref<8x32xf32, #tpu.memory_space<vmem>>, %arg4: memref<32x128xf32, #tpu.memory_space<vmem>>, %arg5: memref<128x128xf32, #tpu.memory_space<vmem>>, %arg6: memref<8x128xf32, #tpu.memory_space<vmem>>, %arg7: memref<8x128xf32, #tpu.memory_space<vmem>>, %arg8: memref<8x128xf32, #tpu.memory_space<vmem>>, %arg9: memref<8x128xf32, #tpu.memory_space<vmem>>) attributes {dimension_semantics = [#tpu.dimension_semantics<parallel>, #tpu.dimension_semantics<arbitrary>], iteration_bounds = array<i64: 1, 1>, scalar_prefetch = 0 : i64, scratch_operands = 3 : i64, tpu.core_type = #tpu.core_type<tc>, window_params = [{transform_indices = @transform_0, window_bounds = array<i64: 8, 32>}, {transform_indices = @transform_1, window_bounds = array<i64: 8, 32>}, {pipeline_mode = #tpu.pipeline_mode<synchronous>, transform_indices = @transform_2, window_bounds = array<i64: 32, 128>}, {pipeline_mode = #tpu.pipeline_mode<synchronous>, transform_indices = @transform_3, window_bounds = array<i64: 128, 128>}, {transform_indices = @transform_4, window_bounds = array<i64: 8, 128>}]} {
    %c0_i32 = arith.constant 0 : i32
    %0 = arith.cmpi eq, %arg1, %c0_i32 : i32
    %1 = arith.extui %0 : i1 to i32
    %c0_i32_0 = arith.constant 0 : i32
    %2 = arith.cmpi ne, %1, %c0_i32_0 : i32
    scf.if %2 {
      %c0_22 = arith.constant 0 : index
      %c0_23 = arith.constant 0 : index
      %34 = vector.load %arg2[%c0_22, %c0_23] : memref<8x32xf32, #tpu.memory_space<vmem>>, vector<8x32xf32>
      %c0_24 = arith.constant 0 : index
      %c0_25 = arith.constant 0 : index
      %35 = vector.load %arg4[%c0_24, %c0_25] : memref<32x128xf32, #tpu.memory_space<vmem>>, vector<32x128xf32>
      %cst_26 = arith.constant dense<0.000000e+00> : vector<8x128xf32>
      %36 = tpu.matmul %34, %35, %cst_26 {dimension_numbers = #tpu.dot_dimension_numbers<[1], [0], [0], [1], [0, 0, 1, 1], [], []>} : vector<8x32xf32>, vector<32x128xf32>, vector<8x128xf32> -> vector<8x128xf32>
      %c0_27 = arith.constant 0 : index
      %c0_28 = arith.constant 0 : index
      %37 = vector.load %arg7[%c0_27, %c0_28] : memref<8x128xf32, #tpu.memory_space<vmem>>, vector<8x128xf32>
      tpu.vector_store %arg7[%c0_27, %c0_28], %36 {strides = array<i32>} : memref<8x128xf32, #tpu.memory_space<vmem>>, vector<8x128xf32>,
      %cst_29 = arith.constant 0.000000e+00 : f32
      %38 = vector.broadcast %cst_29 : f32 to vector<8x128xf32>
      %c0_30 = arith.constant 0 : index
      %c0_31 = arith.constant 0 : index
      %39 = vector.load %arg9[%c0_30, %c0_31] : memref<8x128xf32, #tpu.memory_space<vmem>>, vector<8x128xf32>
      tpu.vector_store %arg9[%c0_30, %c0_31], %38 {strides = array<i32>} : memref<8x128xf32, #tpu.memory_space<vmem>>, vector<8x128xf32>,
    } else {
    }
    %c0 = arith.constant 0 : index
    %c0_1 = arith.constant 0 : index
    %3 = vector.load %arg3[%c0, %c0_1] : memref<8x32xf32, #tpu.memory_space<vmem>>, vector<8x32xf32>
    %c0_2 = arith.constant 0 : index
    %c0_3 = arith.constant 0 : index
    %4 = vector.load %arg4[%c0_2, %c0_3] : memref<32x128xf32, #tpu.memory_space<vmem>>, vector<32x128xf32>
    %cst = arith.constant dense<0.000000e+00> : vector<8x128xf32>
    %5 = tpu.matmul %3, %4, %cst {dimension_numbers = #tpu.dot_dimension_numbers<[1], [0], [0], [1], [0, 0, 1, 1], [], []>} : vector<8x32xf32>, vector<32x128xf32>, vector<8x128xf32> -> vector<8x128xf32>
    %c0_4 = arith.constant 0 : index
    %c0_5 = arith.constant 0 : index
    %6 = vector.load %arg8[%c0_4, %c0_5] : memref<8x128xf32, #tpu.memory_space<vmem>>, vector<8x128xf32>
    tpu.vector_store %arg8[%c0_4, %c0_5], %5 {strides = array<i32>} : memref<8x128xf32, #tpu.memory_space<vmem>>, vector<8x128xf32>,
    %c0_6 = arith.constant 0 : index
    %c0_7 = arith.constant 0 : index
    %7 = vector.load %arg7[%c0_6, %c0_7] : memref<8x128xf32, #tpu.memory_space<vmem>>, vector<8x128xf32>
    %c0_8 = arith.constant 0 : index
    %c0_9 = arith.constant 0 : index
    %8 = vector.load %arg5[%c0_8, %c0_9] : memref<128x128xf32, #tpu.memory_space<vmem>>, vector<128x128xf32>
    %cst_10 = arith.constant 0.000000e+00 : f32
    %9 = vector.broadcast %cst_10 : f32 to vector<8x128xf32>
    %c0_i32_11 = arith.constant 0 : i32
    %c8_i32 = arith.constant 8 : i32
    %10 = arith.muli %c0_i32_11, %c8_i32 : i32
    %11 = tpu.assume_multiple %10, 8 : i32
    %12 = arith.index_cast %11 : i32 to index
    %c0_12 = arith.constant 0 : index
    %13 = vector.load %arg8[%12, %c0_12] : memref<8x128xf32, #tpu.memory_space<vmem>>, vector<8x128xf32>
    %14 = vector.shape_cast %7 : vector<8x128xf32> to vector<8x1x128xf32>
    %15 = vector.shape_cast %13 : vector<8x128xf32> to vector<1x8x128xf32>
    %16 = vector.broadcast %14 : vector<8x1x128xf32> to vector<8x8x128xf32>
    %17 = vector.broadcast %15 : vector<1x8x128xf32> to vector<8x8x128xf32>
    %18 = arith.subf %16, %17 : vector<8x8x128xf32>
    %19 = math.absf %18 : vector<8x8x128xf32>
    %20 = vector.shape_cast %19 : vector<8x8x128xf32> to vector<64x128xf32>
    %cst_13 = arith.constant dense<0.000000e+00> : vector<64x128xf32>
    %21 = tpu.matmul %20, %8, %cst_13 {dimension_numbers = #tpu.dot_dimension_numbers<[1], [0], [0], [1], [0, 0, 1, 1], [], []>} : vector<64x128xf32>, vector<128x128xf32>, vector<64x128xf32> -> vector<64x128xf32>
    %cst_14 = arith.constant 0.000000e+00 : f32
    %22 = vector.broadcast %cst_14 : f32 to vector<64x128xf32>
    %23 = arith.subf %22, %21 : vector<64x128xf32>
    %24 = math.exp %23 : vector<64x128xf32>
    %25 = vector.shape_cast %24 : vector<64x128xf32> to vector<8x8x128xf32>
    %cst_15 = arith.constant dense<0.000000e+00> : vector<8x128xf32>
    %26 = vector.multi_reduction <add>, %25, %cst_15 [1] : vector<8x8x128xf32> to vector<8x128xf32>
    %27 = arith.addf %9, %26 : vector<8x128xf32>
    %c1_i32 = arith.constant 1 : i32
    %c0_16 = arith.constant 0 : index
    %c0_17 = arith.constant 0 : index
    %28 = vector.load %arg9[%c0_16, %c0_17] : memref<8x128xf32, #tpu.memory_space<vmem>>, vector<8x128xf32>
    %29 = arith.addf %28, %27 : vector<8x128xf32>
    %c0_18 = arith.constant 0 : index
    %c0_19 = arith.constant 0 : index
    %30 = vector.load %arg9[%c0_18, %c0_19] : memref<8x128xf32, #tpu.memory_space<vmem>>, vector<8x128xf32>
    tpu.vector_store %arg9[%c0_18, %c0_19], %29 {strides = array<i32>} : memref<8x128xf32, #tpu.memory_space<vmem>>, vector<8x128xf32>,
    %c0_i32_20 = arith.constant 0 : i32
    %31 = arith.cmpi eq, %arg1, %c0_i32_20 : i32
    %32 = arith.extui %31 : i1 to i32
    %c0_i32_21 = arith.constant 0 : i32
    %33 = arith.cmpi ne, %32, %c0_i32_21 : i32
    scf.if %33 {
      %c0_22 = arith.constant 0 : index
      %c0_23 = arith.constant 0 : index
      %34 = vector.load %arg9[%c0_22, %c0_23] : memref<8x128xf32, #tpu.memory_space<vmem>>, vector<8x128xf32>
      %c0_24 = arith.constant 0 : index
      %c0_25 = arith.constant 0 : index
      %35 = vector.load %arg6[%c0_24, %c0_25] : memref<8x128xf32, #tpu.memory_space<vmem>>, vector<8x128xf32>
      tpu.vector_store %arg6[%c0_24, %c0_25], %34 {strides = array<i32>} : memref<8x128xf32, #tpu.memory_space<vmem>>, vector<8x128xf32>,
    } else {
    }
    return
  }
  func.func @transform_0(%arg0: i32, %arg1: i32) -> (i32, i32) {
    %c0_i32 = arith.constant 0 : i32
    %c0_i32_0 = arith.constant 0 : i32
    return %arg0, %c0_i32 : i32, i32
  }
  func.func @transform_1(%arg0: i32, %arg1: i32) -> (i32, i32) {
    %c0_i32 = arith.constant 0 : i32
    %c0_i32_0 = arith.constant 0 : i32
    return %arg1, %c0_i32 : i32, i32
  }
  func.func @transform_2(%arg0: i32, %arg1: i32) -> (i32, i32) {
    %c0_i32 = arith.constant 0 : i32
    %c0_i32_0 = arith.constant 0 : i32
    %c0_i32_1 = arith.constant 0 : i32
    return %c0_i32, %c0_i32_0 : i32, i32
  }
  func.func @transform_3(%arg0: i32, %arg1: i32) -> (i32, i32) {
    %c0_i32 = arith.constant 0 : i32
    %c0_i32_0 = arith.constant 0 : i32
    %c0_i32_1 = arith.constant 0 : i32
    return %c0_i32, %c0_i32_0 : i32, i32
  }
  func.func @transform_4(%arg0: i32, %arg1: i32) -> (i32, i32) {
    %c0_i32 = arith.constant 0 : i32
    %c0_i32_0 = arith.constant 0 : i32
    return %arg0, %c0_i32 : i32, i32
  }
}

</mosaic_0001>

<llo_original>
// kernel: tpu_custom_call.1
$region0: #{tpu_custom_call.1}
  #allocation0 [shape = 'u32[]', space=smem, size = 0x4, offset = 0x4, fixed_abs, tag = 'smem constant byte address 0x4 - core index']
  #allocation1 [shape = 'u32[144,128]{1,0:T(1,128)}', space=vmem, size = 0x12000, scoped, tag = 'internal scratch']
  #allocation2 [shape = 'f32[8,128]{1,0:T(8,128)}', space=vmem, size = 0x1000, scoped, tag = 'scratch operand']
  #allocation3 [shape = 'f32[8,128]{1,0:T(8,128)}', space=vmem, size = 0x1000, scoped, tag = 'scratch operand']
  #allocation4 [shape = 'f32[8,128]{1,0:T(8,128)}', space=vmem, size = 0x1000, scoped, tag = 'scratch operand']
  %s0 = inlined_call_operand.hbm [shape: f32[8,32], index: 0, kind: input, shape index: {}]
  %s1 = inlined_call_operand.hbm [shape: f32[8,32], index: 1, kind: input, shape index: {}]
  %s2 = inlined_call_operand.hbm [shape: f32[32,128], index: 2, kind: input, shape index: {}]
  %s3 = inlined_call_operand.hbm [shape: f32[128,128], index: 3, kind: input, shape index: {}]
  %s4 = inlined_call_operand.hbm [shape: f32[8,128], index: 4, kind: output, shape index: {}]
  %s5 = sld [smem:[#allocation0]]
  $region50: #{tpu_custom_call.1} parent=0
    _
  %s7 = ssub.s32 1, %s5
  %s8 = scalar_select 0, %s7, %s5
  $region1: #{tpu_custom_call.1} parent=0
    #allocation5 [shape = 'u8[4096]{0}', space=vmem, size = 0x1000, scoped, tag = 'input window, operand 0, single buffered']
    #allocation6 [shape = 's32[1]{0}', space=sflag, size = 0x4, scoped, tag = 'scoped memory for tpu_custom_call.1']
    #allocation7 [shape = 's32[1]{0}', space=sflag, size = 0x4, scoped, tag = 'scoped memory for tpu_custom_call.1']
    #allocation8 [shape = 'u8[4096]{0}', space=vmem, size = 0x1000, scoped, tag = 'input window, operand 1, single buffered']
    #allocation9 [shape = 's32[1]{0}', space=sflag, size = 0x4, scoped, tag = 'scoped memory for tpu_custom_call.1']
    #allocation10 [shape = 'u8[16384]{0}', space=vmem, size = 0x4000, scoped, tag = 'input window, operand 2, single buffered']
    #allocation11 [shape = 'u8[65536]{0}', space=vmem, size = 0x10000, scoped, tag = 'input window, operand 3, single buffered']
    #allocation12 [shape = 's32[1]{0}', space=sflag, size = 0x4, scoped, tag = 'scoped memory for tpu_custom_call.1']
    #allocation13 [shape = 'u8[4096]{0}', space=vmem, size = 0x1000, scoped, tag = 'output window, operand 0, single buffered']
    %9 = vsyncpa [#allocation6], 0
    %10 = vsyncpa [#allocation9], 0
    %11 = vsyncpa [#allocation12], 0
    %12 = vsyncpa [#allocation7], 0
    // Predicated region
    $region2: #{tpu_custom_call.1} parent=1 // pred_check
      _
    $region3: #{tpu_custom_call.1} parent=1 // pred_check_branch
      %14 = sbr.rel (0) target = $region5
    $region4: #{tpu_custom_call.1} parent=1 // pred_region
      %s16 = ssub.s32 128, 128
      %17 = vsyncadd [#allocation6], %s16
      %s19 = sshll.u32 [#allocation5], 4
      %s20 = int_to_ptr.vmem [resolvable:$true] %s19
      %22 = dma.hbm_to_vmem [thread:$0]  %s0, 128, %s20, [#allocation6]
    $region5: #{tpu_custom_call.1} parent=1 // pred_fallthru
      _
    // Predicated region
    $region6: #{tpu_custom_call.1} parent=1 // pred_check
      _
    $region7: #{tpu_custom_call.1} parent=1 // pred_check_branch
      %24 = sbr.rel (0) target = $region9
    $region8: #{tpu_custom_call.1} parent=1 // pred_region
      %s26 = ssub.s32 128, 128
      %27 = vsyncadd [#allocation9], %s26
      %s29 = sshll.u32 [#allocation8], 4
      %s30 = int_to_ptr.vmem [resolvable:$true] %s29
      %32 = dma.hbm_to_vmem [thread:$0]  %s1, 128, %s30, [#allocation9]
    $region9: #{tpu_custom_call.1} parent=1 // pred_fallthru
      _
    // Predicated region
    $region10: #{tpu_custom_call.1} parent=1 // pred_check
      _
    $region11: #{tpu_custom_call.1} parent=1 // pred_check_branch
      %34 = sbr.rel (0) target = $region13
    $region12: #{tpu_custom_call.1} parent=1 // pred_region
      %s36 = ssub.s32 512, 512
      %37 = vsyncadd [#allocation9], %s36
      %s38 = sshll.u32 [#allocation10], 4
      %s39 = int_to_ptr.vmem [resolvable:$true] %s38
      %44 = dma.hbm_to_vmem [thread:$0]  %s2, 512, %s39, [#allocation9], 128, 128, 8
    $region13: #{tpu_custom_call.1} parent=1 // pred_fallthru
      _
    // Predicated region
    $region14: #{tpu_custom_call.1} parent=1 // pred_check
      _
    $region15: #{tpu_custom_call.1} parent=1 // pred_check_branch
      %46 = sbr.rel (0) target = $region17
    $region16: #{tpu_custom_call.1} parent=1 // pred_region
      %s48 = ssub.s32 2048, 2048
      %49 = vsyncadd [#allocation12], %s48
      %s50 = sshll.u32 [#allocation11], 4
      %s51 = int_to_ptr.vmem [resolvable:$true] %s50
      %56 = dma.hbm_to_vmem [thread:$0]  %s3, 2048, %s51, [#allocation12], 128, 128, 8
    $region17: #{tpu_custom_call.1} parent=1 // pred_fallthru
      _
    // Predicated region
    $region18: #{tpu_custom_call.1} parent=1 // pred_check
      _
    $region19: #{tpu_custom_call.1} parent=1 // pred_check_branch
      %58 = sbr.rel (0) target = $region21
    $region20: #{tpu_custom_call.1} parent=1 // pred_region
      %59 = dma.done [#allocation6], 128
    $region21: #{tpu_custom_call.1} parent=1 // pred_fallthru
      _
    // Predicated region
    $region22: #{tpu_custom_call.1} parent=1 // pred_check
      _
    $region23: #{tpu_custom_call.1} parent=1 // pred_check_branch
      %61 = sbr.rel (0) target = $region25
    $region24: #{tpu_custom_call.1} parent=1 // pred_region
      %62 = dma.done [#allocation9], 128
    $region25: #{tpu_custom_call.1} parent=1 // pred_fallthru
      _
    // Predicated region
    $region26: #{tpu_custom_call.1} parent=1 // pred_check
      _
    $region27: #{tpu_custom_call.1} parent=1 // pred_check_branch
      %64 = sbr.rel (0) target = $region29
    $region28: #{tpu_custom_call.1} parent=1 // pred_region
      %65 = dma.done [#allocation9], 512
    $region29: #{tpu_custom_call.1} parent=1 // pred_fallthru
      _
    // Predicated region
    $region30: #{tpu_custom_call.1} parent=1 // pred_check
      _
    $region31: #{tpu_custom_call.1} parent=1 // pred_check_branch
      %67 = sbr.rel (0) target = $region33
    $region32: #{tpu_custom_call.1} parent=1 // pred_region
      %68 = dma.done [#allocation12], 2048
    $region33: #{tpu_custom_call.1} parent=1 // pred_fallthru
      _
    %p69 = scmp.eq.s32.totalorder 0, 0
    // Predicated region
    $region34: #{tpu_custom_call.1} parent=1 // pred_check
      %p70 = pneg %p69
    $region35: #{tpu_custom_call.1} parent=1 // pred_check_branch
      %72 = sbr.rel (%p70) target = $region37
    $region36: #{tpu_custom_call.1} parent=1 // pred_region
      %v73 = vld [vmem:[#allocation5] sm:$0xff]
      %v74 = vld [vmem:[#allocation10] sm:$0xff]
      %v75 = vld [vmem:[#allocation10 + $0x8] sm:$0xff]
      %v76 = vld [vmem:[#allocation10 + $0x10] sm:$0xff]
      %v77 = vld [vmem:[#allocation10 + $0x18] sm:$0xff]
      %vm78 = vcmask 261120
      %v80 = vsel %vm78, %v73, 0
      %82 = vmatprep.subr.mxu0 0.0
      %83 = vmatpush1.msra.mxu0 %v74
      %84 = vmatprep.subr.mxu0 0.0
      %85 = vmatpush1.msra.mxu0 %v75
      %86 = vmatprep.subr.mxu0 0.0
      %87 = vmatpush1.msra.mxu0 %v76
      %88 = vmatprep.subr.mxu0 0.0
      %89 = vmatpush1.msra.mxu0 %v77
      %90 = vmatprep.subr.mxu0 0.0
      %91 = vmatpush1.msra.mxu0 0.0
      %92 = vmatprep.subr.mxu0 0.0
      %93 = vmatpush1.msra.mxu0 0.0
      %94 = vmatprep.subr.mxu0 0.0
      %95 = vmatpush1.msra.mxu0 0.0
      %96 = vmatprep.subr.mxu0 0.0
      %97 = vmatpush1.msra.mxu0 0.0
      %98 = vmatprep.subr.mxu0 0.0
      %99 = vmatpush1.msra.mxu0 0.0
      %100 = vmatprep.subr.mxu0 0.0
      %101 = vmatpush1.msra.mxu0 0.0
      %102 = vmatprep.subr.mxu0 0.0
      %103 = vmatpush1.msra.mxu0 0.0
      %104 = vmatprep.subr.mxu0 0.0
      %105 = vmatpush1.msra.mxu0 0.0
      %106 = vmatprep.subr.mxu0 0.0
      %107 = vmatpush1.msra.mxu0 0.0
      %108 = vmatprep.subr.mxu0 0.0
      %109 = vmatpush1.msra.mxu0 0.0
      %110 = vmatprep.subr.mxu0 0.0
      %111 = vmatpush1.msra.mxu0 0.0
      %112 = vmatprep.subr.mxu0 0.0
      %113 = vmatpush1.msra.mxu0 0.0
      %114 = vmatprep.subr.mxu0 0.0
      %115 = vmatpush1.msra.mxu0 0.0
      %116 = vmatprep.subr.mxu0 0.0
      %117 = vmatpush1.msra.mxu0 0.0
      %118 = vmatprep.subr.mxu0 0.0
      %119 = vmatpush1.msra.mxu0 0.0
      %120 = vmatprep.subr.mxu0 0.0
      %121 = vmatpush1.msra.mxu0 0.0
      %122 = vmatprep.subr.mxu0 0.0
      %123 = vmatpush1.msra.mxu0 0.0
      %124 = vmatprep.subr.mxu0 0.0
      %125 = vmatpush1.msra.mxu0 0.0
      %126 = vmatprep.subr.mxu0 0.0
      %127 = vmatpush1.msra.mxu0 0.0
      %128 = vmatprep.subr.mxu0 0.0
      %129 = vmatpush1.msra.mxu0 0.0
      %130 = vmatprep.subr.mxu0 0.0
      %131 = vmatpush1.msra.mxu0 0.0
      %132 = vmatprep.subr.mxu0 0.0
      %133 = vmatpush1.msra.mxu0 0.0
      %134 = vmatprep.subr.mxu0 0.0
      %135 = vmatpush1.msra.mxu0 0.0
      %136 = vmatprep.subr.mxu0 0.0
      %137 = vmatpush1.msra.mxu0 0.0
      %138 = vmatprep.subr.mxu0 0.0
      %139 = vmatpush1.msra.mxu0 0.0
      %140 = vmatprep.subr.mxu0 0.0
      %141 = vmatpush1.msra.mxu0 0.0
      %142 = vmatprep.subr.mxu0 0.0
      %143 = vmatpush1.msra.mxu0 0.0
      %144 = vmatprep.subr.mxu0 0.0
      %145 = vmatpush1.msra.mxu0 0.0
      %146 = vmatprep.mubr.f32.mxu0 0.0
      %147 = vmatmul.mubr.f32.gmra.mrb[0].mxu0 %v80
      %v148 = vpop.f32.mrb[0].mxu0
      %v149 = vadd.f32 0.0, %v148
      %v150 = vpop.f32.mrb[0].mxu0
      %151 = vdwg.mxu0
      %152 = vst [vmem:[#allocation2] sm:$0xff] %v149
      %153 = vst [vmem:[#allocation4] sm:$0xff] 0.0
    $region37: #{tpu_custom_call.1} parent=1 // pred_fallthru
      _
    %v154 = vld [vmem:[#allocation8] sm:$0xff]
    %v155 = vld [vmem:[#allocation10] sm:$0xff]
    %v156 = vld [vmem:[#allocation10 + $0x8] sm:$0xff]
    %v157 = vld [vmem:[#allocation10 + $0x10] sm:$0xff]
    %v158 = vld [vmem:[#allocation10 + $0x18] sm:$0xff]
    %vm159 = vcmask 261120
    %v161 = vsel %vm159, %v154, 0
    %163 = vmatprep.subr.mxu0 0.0
    %164 = vmatpush1.msra.mxu0 %v155
    %165 = vmatprep.subr.mxu0 0.0
    %166 = vmatpush1.msra.mxu0 %v156
    %167 = vmatprep.subr.mxu0 0.0
    %168 = vmatpush1.msra.mxu0 %v157
    %169 = vmatprep.subr.mxu0 0.0
    %170 = vmatpush1.msra.mxu0 %v158
    %171 = vmatprep.subr.mxu0 0.0
    %172 = vmatpush1.msra.mxu0 0.0
    %173 = vmatprep.subr.mxu0 0.0
    %174 = vmatpush1.msra.mxu0 0.0
    %175 = vmatprep.subr.mxu0 0.0
    %176 = vmatpush1.msra.mxu0 0.0
    %177 = vmatprep.subr.mxu0 0.0
    %178 = vmatpush1.msra.mxu0 0.0
    %179 = vmatprep.subr.mxu0 0.0
    %180 = vmatpush1.msra.mxu0 0.0
    %181 = vmatprep.subr.mxu0 0.0
    %182 = vmatpush1.msra.mxu0 0.0
    %183 = vmatprep.subr.mxu0 0.0
    %184 = vmatpush1.msra.mxu0 0.0
    %185 = vmatprep.subr.mxu0 0.0
    %186 = vmatpush1.msra.mxu0 0.0
    %187 = vmatprep.subr.mxu0 0.0
    %188 = vmatpush1.msra.mxu0 0.0
    %189 = vmatprep.subr.mxu0 0.0
    %190 = vmatpush1.msra.mxu0 0.0
    %191 = vmatprep.subr.mxu0 0.0
    %192 = vmatpush1.msra.mxu0 0.0
    %193 = vmatprep.subr.mxu0 0.0
    %194 = vmatpush1.msra.mxu0 0.0
    %195 = vmatprep.subr.mxu0 0.0
    %196 = vmatpush1.msra.mxu0 0.0
    %197 = vmatprep.subr.mxu0 0.0
    %198 = vmatpush1.msra.mxu0 0.0
    %199 = vmatprep.subr.mxu0 0.0
    %200 = vmatpush1.msra.mxu0 0.0
    %201 = vmatprep.subr.mxu0 0.0
    %202 = vmatpush1.msra.mxu0 0.0
    %203 = vmatprep.subr.mxu0 0.0
    %204 = vmatpush1.msra.mxu0 0.0
    %205 = vmatprep.subr.mxu0 0.0
    %206 = vmatpush1.msra.mxu0 0.0
    %207 = vmatprep.subr.mxu0 0.0
    %208 = vmatpush1.msra.mxu0 0.0
    %209 = vmatprep.subr.mxu0 0.0
    %210 = vmatpush1.msra.mxu0 0.0
    %211 = vmatprep.subr.mxu0 0.0
    %212 = vmatpush1.msra.mxu0 0.0
    %213 = vmatprep.subr.mxu0 0.0
    %214 = vmatpush1.msra.mxu0 0.0
    %215 = vmatprep.subr.mxu0 0.0
    %216 = vmatpush1.msra.mxu0 0.0
    %217 = vmatprep.subr.mxu0 0.0
    %218 = vmatpush1.msra.mxu0 0.0
    %219 = vmatprep.subr.mxu0 0.0
    %220 = vmatpush1.msra.mxu0 0.0
    %221 = vmatprep.subr.mxu0 0.0
    %222 = vmatpush1.msra.mxu0 0.0
    %223 = vmatprep.subr.mxu0 0.0
    %224 = vmatpush1.msra.mxu0 0.0
    %225 = vmatprep.subr.mxu0 0.0
    %226 = vmatpush1.msra.mxu0 0.0
    %227 = vmatprep.mubr.f32.mxu0 0.0
    %228 = vmatmul.mubr.f32.gmra.mrb[0].mxu0 %v161
    %v229 = vpop.f32.mrb[0].mxu0
    %v230 = vadd.f32 0.0, %v229
    %v231 = vpop.f32.mrb[0].mxu0
    %232 = vdwg.mxu0
    %233 = vst [vmem:[#allocation3] sm:$0xff] %v230
    %v234 = vld [vmem:[#allocation2] sm:$0xff]
    %v235 = vld [vmem:[#allocation11] sm:$0xff]
    %v236 = vld [vmem:[#allocation11 + $0x8] sm:$0xff]
    %v237 = vld [vmem:[#allocation11 + $0x10] sm:$0xff]
    %v238 = vld [vmem:[#allocation11 + $0x18] sm:$0xff]
    %v239 = vld [vmem:[#allocation11 + $0x20] sm:$0xff]
    %v240 = vld [vmem:[#allocation11 + $0x28] sm:$0xff]
    %v241 = vld [vmem:[#allocation11 + $0x30] sm:$0xff]
    %v242 = vld [vmem:[#allocation11 + $0x38] sm:$0xff]
    %v243 = vld [vmem:[#allocation11 + $0x40] sm:$0xff]
    %v244 = vld [vmem:[#allocation11 + $0x48] sm:$0xff]
    %v245 = vld [vmem:[#allocation11 + $0x50] sm:$0xff]
    %v246 = vld [vmem:[#allocation11 + $0x58] sm:$0xff]
    %v247 = vld [vmem:[#allocation11 + $0x60] sm:$0xff]
    %v248 = vld [vmem:[#allocation11 + $0x68] sm:$0xff]
    %v249 = vld [vmem:[#allocation11 + $0x70] sm:$0xff]
    %v250 = vld [vmem:[#allocation11 + $0x78] sm:$0xff]
    %v251 = vld [vmem:[#allocation3] sm:$0xff]
    %v253 = vcombine.high %v234, %v234
    %v255 = vunpack.c.l.s4 1966171168
    %v256 = vunpack.c.0.s8 %v255
    %v257 = vlaneseq
    %v258 = vshrl.u32 %v257, 7
    %v259 = vsub.s32 %v256, %v258
    %v260 = vrot.slane %v234, %v259
    %v262 = vunpack.c.l.s4 1966171168
    %v263 = vunpack.c.0.s8 %v262
    %v264 = vlaneseq
    %v265 = vshrl.u32 %v264, 7
    %v266 = vsub.s32 %v263, %v265
    %v267 = vrot.slane %v253, %v266
    %v268 = vcombine.high %v260, %v260
    %v269 = vcombine.high %v267, %v267
    %v271 = vunpack.c.l.s4 1966171168
    %v272 = vunpack.c.0.s8 %v271
    %v273 = vlaneseq
    %v274 = vshrl.u32 %v273, 7
    %v275 = vsub.s32 %v272, %v274
    %v276 = vrot.slane %v260, %v275
    %v278 = vunpack.c.l.s4 1966171168
    %v279 = vunpack.c.0.s8 %v278
    %v280 = vlaneseq
    %v281 = vshrl.u32 %v280, 7
    %v282 = vsub.s32 %v279, %v281
    %v283 = vrot.slane %v267, %v282
    %v285 = vunpack.c.l.s4 1966171168
    %v286 = vunpack.c.0.s8 %v285
    %v287 = vlaneseq
    %v288 = vshrl.u32 %v287, 7
    %v289 = vsub.s32 %v286, %v288
    %v290 = vrot.slane %v268, %v289
    %v292 = vunpack.c.l.s4 1966171168
    %v293 = vunpack.c.0.s8 %v292
    %v294 = vlaneseq
    %v295 = vshrl.u32 %v294, 7
    %v296 = vsub.s32 %v293, %v295
    %v297 = vrot.slane %v269, %v296
    %v298 = vcombine.high %v276, %v276
    %v299 = vcombine.high %v283, %v283
    %v300 = vcombine.high %v290, %v290
    %v301 = vcombine.high %v297, %v297
    %v302 = vlaneseq
    %v303 = vshrl.u32 %v302, 7
    %v304 = vsub.s32 0, %v303
    %v305 = vrot.slane %v276, %v304
    %v306 = vlaneseq
    %v307 = vshrl.u32 %v306, 7
    %v308 = vsub.s32 0, %v307
    %v309 = vrot.slane %v290, %v308
    %v310 = vlaneseq
    %v311 = vshrl.u32 %v310, 7
    %v312 = vsub.s32 0, %v311
    %v313 = vrot.slane %v298, %v312
    %v314 = vlaneseq
    %v315 = vshrl.u32 %v314, 7
    %v316 = vsub.s32 0, %v315
    %v317 = vrot.slane %v300, %v316
    %v318 = vlaneseq
    %v319 = vshrl.u32 %v318, 7
    %v320 = vsub.s32 0, %v319
    %v321 = vrot.slane %v283, %v320
    %v322 = vlaneseq
    %v323 = vshrl.u32 %v322, 7
    %v324 = vsub.s32 0, %v323
    %v325 = vrot.slane %v297, %v324
    %v326 = vlaneseq
    %v327 = vshrl.u32 %v326, 7
    %v328 = vsub.s32 0, %v327
    %v329 = vrot.slane %v299, %v328
    %v330 = vlaneseq
    %v331 = vshrl.u32 %v330, 7
    %v332 = vsub.s32 0, %v331
    %v333 = vrot.slane %v301, %v332
    %v342 = vsub.f32 %v305, %v251
    %v343 = vsub.f32 %v309, %v251
    %v344 = vsub.f32 %v313, %v251
    %v345 = vsub.f32 %v317, %v251
    %v346 = vsub.f32 %v321, %v251
    %v347 = vsub.f32 %v325, %v251
    %v348 = vsub.f32 %v329, %v251
    %v349 = vsub.f32 %v333, %v251
    %v350 = vand.u32 2147483647, %v342
    %v351 = vand.u32 2147483647, %v343
    %v352 = vand.u32 2147483647, %v344
    %v353 = vand.u32 2147483647, %v345
    %v354 = vand.u32 2147483647, %v346
    %v355 = vand.u32 2147483647, %v347
    %v356 = vand.u32 2147483647, %v348
    %v357 = vand.u32 2147483647, %v349
    %358 = vmatprep.subr.mxu0 0.0
    %359 = vmatpush1.msra.mxu0 %v235
    %360 = vmatprep.subr.mxu0 0.0
    %361 = vmatpush1.msra.mxu0 %v236
    %362 = vmatprep.subr.mxu0 0.0
    %363 = vmatpush1.msra.mxu0 %v237
    %364 = vmatprep.subr.mxu0 0.0
    %365 = vmatpush1.msra.mxu0 %v238
    %366 = vmatprep.subr.mxu0 0.0
    %367 = vmatpush1.msra.mxu0 %v239
    %368 = vmatprep.subr.mxu0 0.0
    %369 = vmatpush1.msra.mxu0 %v240
    %370 = vmatprep.subr.mxu0 0.0
    %371 = vmatpush1.msra.mxu0 %v241
    %372 = vmatprep.subr.mxu0 0.0
    %373 = vmatpush1.msra.mxu0 %v242
    %374 = vmatprep.subr.mxu0 0.0
    %375 = vmatpush1.msra.mxu0 %v243
    %376 = vmatprep.subr.mxu0 0.0
    %377 = vmatpush1.msra.mxu0 %v244
    %378 = vmatprep.subr.mxu0 0.0
    %379 = vmatpush1.msra.mxu0 %v245
    %380 = vmatprep.subr.mxu0 0.0
    %381 = vmatpush1.msra.mxu0 %v246
    %382 = vmatprep.subr.mxu0 0.0
    %383 = vmatpush1.msra.mxu0 %v247
    %384 = vmatprep.subr.mxu0 0.0
    %385 = vmatpush1.msra.mxu0 %v248
    %386 = vmatprep.subr.mxu0 0.0
    %387 = vmatpush1.msra.mxu0 %v249
    %388 = vmatprep.subr.mxu0 0.0
    %389 = vmatpush1.msra.mxu0 %v250
    %390 = vmatprep.subr.mxu0 0.0
    %391 = vmatpush1.msra.mxu0 0.0
    %392 = vmatprep.subr.mxu0 0.0
    %393 = vmatpush1.msra.mxu0 0.0
    %394 = vmatprep.subr.mxu0 0.0
    %395 = vmatpush1.msra.mxu0 0.0
    %396 = vmatprep.subr.mxu0 0.0
    %397 = vmatpush1.msra.mxu0 0.0
    %398 = vmatprep.subr.mxu0 0.0
    %399 = vmatpush1.msra.mxu0 0.0
    %400 = vmatprep.subr.mxu0 0.0
    %401 = vmatpush1.msra.mxu0 0.0
    %402 = vmatprep.subr.mxu0 0.0
    %403 = vmatpush1.msra.mxu0 0.0
    %404 = vmatprep.subr.mxu0 0.0
    %405 = vmatpush1.msra.mxu0 0.0
    %406 = vmatprep.subr.mxu0 0.0
    %407 = vmatpush1.msra.mxu0 0.0
    %408 = vmatprep.subr.mxu0 0.0
    %409 = vmatpush1.msra.mxu0 0.0
    %410 = vmatprep.subr.mxu0 0.0
    %411 = vmatpush1.msra.mxu0 0.0
    %412 = vmatprep.subr.mxu0 0.0
    %413 = vmatpush1.msra.mxu0 0.0
    %414 = vmatprep.subr.mxu0 0.0
    %415 = vmatpush1.msra.mxu0 0.0
    %416 = vmatprep.subr.mxu0 0.0
    %417 = vmatpush1.msra.mxu0 0.0
    %418 = vmatprep.subr.mxu0 0.0
    %419 = vmatpush1.msra.mxu0 0.0
    %420 = vmatprep.subr.mxu0 0.0
    %421 = vmatpush1.msra.mxu0 0.0
    %422 = vmatprep.mubr.f32.mxu0 0.0
    %423 = vmatmul.mubr.f32.gmra.mrb[0].mxu0 %v350
    %v424 = vpop.f32.mrb[0].mxu0
    %v425 = vadd.f32 0.0, %v424
    %v426 = vpop.f32.mrb[0].mxu0
    %427 = vmatprep.mubr.f32.mxu0 0.0
    %428 = vmatmul.mubr.f32.gmra.mrb[0].mxu0 %v351
    %v429 = vpop.f32.mrb[0].mxu0
    %v430 = vadd.f32 0.0, %v429
    %v431 = vpop.f32.mrb[0].mxu0
    %432 = vmatprep.mubr.f32.mxu0 0.0
    %433 = vmatmul.mubr.f32.gmra.mrb[0].mxu0 %v352
    %v434 = vpop.f32.mrb[0].mxu0
    %v435 = vadd.f32 0.0, %v434
    %v436 = vpop.f32.mrb[0].mxu0
    %437 = vmatprep.mubr.f32.mxu0 0.0
    %438 = vmatmul.mubr.f32.gmra.mrb[0].mxu0 %v353
    %v439 = vpop.f32.mrb[0].mxu0
    %v440 = vadd.f32 0.0, %v439
    %v441 = vpop.f32.mrb[0].mxu0
    %442 = vmatprep.mubr.f32.mxu0 0.0
    %443 = vmatmul.mubr.f32.gmra.mrb[0].mxu0 %v354
    %v444 = vpop.f32.mrb[0].mxu0
    %v445 = vadd.f32 0.0, %v444
    %v446 = vpop.f32.mrb[0].mxu0
    %447 = vmatprep.mubr.f32.mxu0 0.0
    %448 = vmatmul.mubr.f32.gmra.mrb[0].mxu0 %v355
    %v449 = vpop.f32.mrb[0].mxu0
    %v450 = vadd.f32 0.0, %v449
    %v451 = vpop.f32.mrb[0].mxu0
    %452 = vmatprep.mubr.f32.mxu0 0.0
    %453 = vmatmul.mubr.f32.gmra.mrb[0].mxu0 %v356
    %v454 = vpop.f32.mrb[0].mxu0
    %v455 = vadd.f32 0.0, %v454
    %v456 = vpop.f32.mrb[0].mxu0
    %457 = vmatprep.mubr.f32.mxu0 0.0
    %458 = vmatmul.mubr.f32.gmra.mrb[0].mxu0 %v357
    %v459 = vpop.f32.mrb[0].mxu0
    %v460 = vadd.f32 0.0, %v459
    %v461 = vpop.f32.mrb[0].mxu0
    %462 = vdwg.mxu0
    %v463 = vsub.f32 0.0, %v425
    %v464 = vsub.f32 0.0, %v430
    %v465 = vsub.f32 0.0, %v435
    %v466 = vsub.f32 0.0, %v440
    %v467 = vsub.f32 0.0, %v445
    %v468 = vsub.f32 0.0, %v450
    %v469 = vsub.f32 0.0, %v455
    %v470 = vsub.f32 0.0, %v460
    %v471 = vmul.f32 %v463, 1.442695
    %v472 = vpow.pop %v471
    %v473 = vmul.f32 %v464, 1.442695
    %v474 = vpow.pop %v473
    %v475 = vmul.f32 %v465, 1.442695
    %v476 = vpow.pop %v475
    %v477 = vmul.f32 %v466, 1.442695
    %v478 = vpow.pop %v477
    %v479 = vmul.f32 %v467, 1.442695
    %v480 = vpow.pop %v479
    %v481 = vmul.f32 %v468, 1.442695
    %v482 = vpow.pop %v481
    %v483 = vmul.f32 %v469, 1.442695
    %v484 = vpow.pop %v483
    %v485 = vmul.f32 %v470, 1.442695
    %v486 = vpow.pop %v485
    %v487 = vrot.slane %v472, 4
    %v488 = vadd.f32 %v472, %v487
    %v489 = vrot.slane %v488, 2
    %v490 = vadd.f32 %v488, %v489
    %v491 = vrot.slane %v490, 1
    %v492 = vadd.f32 %v490, %v491
    %v493 = vrot.slane %v474, 4
    %v494 = vadd.f32 %v474, %v493
    %v495 = vrot.slane %v494, 2
    %v496 = vadd.f32 %v494, %v495
    %v497 = vrot.slane %v496, 1
    %v498 = vadd.f32 %v496, %v497
    %v499 = vrot.slane %v476, 4
    %v500 = vadd.f32 %v476, %v499
    %v501 = vrot.slane %v500, 2
    %v502 = vadd.f32 %v500, %v501
    %v503 = vrot.slane %v502, 1
    %v504 = vadd.f32 %v502, %v503
    %v505 = vrot.slane %v478, 4
    %v506 = vadd.f32 %v478, %v505
    %v507 = vrot.slane %v506, 2
    %v508 = vadd.f32 %v506, %v507
    %v509 = vrot.slane %v508, 1
    %v510 = vadd.f32 %v508, %v509
    %v511 = vrot.slane %v480, 4
    %v512 = vadd.f32 %v480, %v511
    %v513 = vrot.slane %v512, 2
    %v514 = vadd.f32 %v512, %v513
    %v515 = vrot.slane %v514, 1
    %v516 = vadd.f32 %v514, %v515
    %v517 = vrot.slane %v482, 4
    %v518 = vadd.f32 %v482, %v517
    %v519 = vrot.slane %v518, 2
    %v520 = vadd.f32 %v518, %v519
    %v521 = vrot.slane %v520, 1
    %v522 = vadd.f32 %v520, %v521
    %v523 = vrot.slane %v484, 4
    %v524 = vadd.f32 %v484, %v523
    %v525 = vrot.slane %v524, 2
    %v526 = vadd.f32 %v524, %v525
    %v527 = vrot.slane %v526, 1
    %v528 = vadd.f32 %v526, %v527
    %v529 = vrot.slane %v486, 4
    %v530 = vadd.f32 %v486, %v529
    %v531 = vrot.slane %v530, 2
    %v532 = vadd.f32 %v530, %v531
    %v533 = vrot.slane %v532, 1
    %v534 = vadd.f32 %v532, %v533
    %v535 = vadd.f32 %v492, 0.0
    %v536 = vadd.f32 %v498, 0.0
    %v537 = vadd.f32 %v504, 0.0
    %v538 = vadd.f32 %v510, 0.0
    %v539 = vadd.f32 %v516, 0.0
    %v540 = vadd.f32 %v522, 0.0
    %v541 = vadd.f32 %v528, 0.0
    %v542 = vadd.f32 %v534, 0.0
    %v543 = vld [vmem:[#allocation4] sm:$0xff]
    %vm552 = vcmask 1041409
    %v553 = vsel %vm552, %v536, %v535
    %vm554 = vcmask 1042434
    %v555 = vsel %vm554, %v537, %v553
    %vm556 = vcmask 1043459
    %v557 = vsel %vm556, %v538, %v555
    %vm558 = vcmask 1044484
    %v559 = vsel %vm558, %v539, %v557
    %vm560 = vcmask 1045509
    %v561 = vsel %vm560, %v540, %v559
    %vm562 = vcmask 1046534
    %v563 = vsel %vm562, %v541, %v561
    %vm564 = vcmask 1047559
    %v565 = vsel %vm564, %v542, %v563
    %v567 = vadd.f32 %v543, %v565
    %568 = vst [vmem:[#allocation4] sm:$0xff] %v567
    // Predicated region
    $region38: #{tpu_custom_call.1} parent=1 // pred_check
      %p569 = pneg %p69
    $region39: #{tpu_custom_call.1} parent=1 // pred_check_branch
      %571 = sbr.rel (%p569) target = $region41
    $region40: #{tpu_custom_call.1} parent=1 // pred_region
      %v572 = vld [vmem:[#allocation4] sm:$0xff]
      %573 = vst [vmem:[#allocation13] sm:$0xff] %v572
    $region41: #{tpu_custom_call.1} parent=1 // pred_fallthru
      _
    // Predicated region
    $region42: #{tpu_custom_call.1} parent=1 // pred_check
      _
    $region43: #{tpu_custom_call.1} parent=1 // pred_check_branch
      %575 = sbr.rel (0) target = $region45
    $region44: #{tpu_custom_call.1} parent=1 // pred_region
      %s577 = ssub.s32 128, 128
      %578 = vsyncadd [#allocation7], %s577
      %s580 = sshll.u32 [#allocation13], 4
      %s581 = int_to_ptr.vmem [resolvable:$true] %s580
      %583 = dma.vmem_to_hbm [thread:$0]  %s581, 128, %s4, [#allocation7]
    $region45: #{tpu_custom_call.1} parent=1 // pred_fallthru
      _
    // Predicated region
    $region46: #{tpu_custom_call.1} parent=1 // pred_check
      _
    $region47: #{tpu_custom_call.1} parent=1 // pred_check_branch
      %585 = sbr.rel (0) target = $region49
    $region48: #{tpu_custom_call.1} parent=1 // pred_region
      %586 = dma.done [#allocation7], 128
    $region49: #{tpu_custom_call.1} parent=1 // pred_fallthru
      _
    %587 = vsyncpa [#allocation6], 1
    %588 = vsyncpa [#allocation9], 1
    %589 = vsyncpa [#allocation12], 1
    %590 = vsyncpa [#allocation7], 1

</llo_original>
